<compile_context>
chip_gen: v7x
topology: tpu7x:2x2x1
jax: 0.10.0
libtpu: 0.0.40
codegen_flags: <defaults>
</compile_context>

<pallas_src>
import functools

import jax
import jax.numpy as jnp
from jax.experimental import pallas as pl
from jax.experimental.pallas import tpu as pltpu

_LANES = 128
_SUBLANES = 8


def _bce_smoothed_kernel(x_ref, t_ref, out_ref, *, n_valid, label_smoothing,
                         block_rows):
    i = pl.program_id(0)

    @pl.when(i == 0)
    def _():
        out_ref[...] = jnp.zeros_like(out_ref)

    x = x_ref[...].astype(jnp.float32)
    t = t_ref[...].astype(jnp.float32)

    # 2 EUP transcendentals (exp, log1p) + 1 approx vrcp per element.
    e = jnp.exp(-jnp.abs(x))
    sp = jnp.maximum(x, 0.0) + jnp.log1p(e)            # softplus(x), stable
    inv_1pe = pl.reciprocal(1.0 + e, approx=True)
    p = jnp.where(x >= 0.0, inv_1pe, e * inv_1pe)      # sigmoid(x)

    # bce = sp - x*t ; ent = sp - p*x   (torch's -100 log clamp dropped: it
    # only changes the result for |x| > ~100).
    # contrib = bce - ls*ent = (1-ls)*sp - x*t + ls*(p*x)
    contrib = (1.0 - label_smoothing) * sp - x * t + label_smoothing * (p * x)

    block_elems = block_rows * _LANES
    block_start = i * block_elems
    block_end = block_start + block_elems
    sub_blocks = block_rows // _SUBLANES

    def _pre_reduce(v):                    # (block_rows,128) -> (8,128), VPU adds
        return jnp.sum(v.reshape(sub_blocks, _SUBLANES, _LANES), axis=0)

    # Full interior tiles: plain pre-reduce + accumulate, no mask work.
    @pl.when(block_end <= n_valid)
    def _():
        out_ref[...] += _pre_reduce(contrib)

    # Ragged / padded tail tile: mask by global flat index (NaN-safe select).
    @pl.when(block_end > n_valid)
    def _():
        r = jax.lax.broadcasted_iota(jnp.int32, contrib.shape, 0)
        c = jax.lax.broadcasted_iota(jnp.int32, contrib.shape, 1)
        flat = block_start + r * _LANES + c
        out_ref[...] += _pre_reduce(jnp.where(flat < n_valid, contrib, 0.0))


def bce_with_logits_loss_smoothed(logits, target, label_smoothing=0.0,
                                  *, block_rows=2048):
    """JAX/Pallas equivalent of BCEWithLogitsLossSmoothed(label_smoothing)."""
    # TODO(synk): only reduction='mean' (the module default) is implemented;
    # 'sum'/'none' change the output shape/semantics.
    assert 0.0 <= label_smoothing <= 1.0
    x = jnp.squeeze(logits).reshape(-1)
    t = jnp.squeeze(target).reshape(-1)
    assert x.shape == t.shape, (x.shape, t.shape)
    n = x.shape[0]
    assert n > 0, "mean over empty input is NaN in torch; guard explicitly"
    assert n < 2**31 - _SUBLANES * _LANES, "int32 flat-index masking"

    # Pad the flat length to a multiple of 8*128 so the row count is a multiple
    # of the sublane tile and of the (8,128) pre-reduced accumulator
    # (<= 1023 extra elements; the padded tail is masked in-kernel).
    rows = pl.cdiv(n, _SUBLANES * _LANES) * _SUBLANES
    padded = rows * _LANES
    if padded != n:
        x = jnp.pad(x, (0, padded - n))
        t = jnp.pad(t, (0, padded - n))
    x2 = x.reshape(rows, _LANES)           # native dtype; cast to f32 in-kernel
    t2 = t.reshape(rows, _LANES)

    block_rows = min(block_rows, rows)     # both are multiples of 8
    nb = pl.cdiv(rows, block_rows)

    kernel = functools.partial(
        _bce_smoothed_kernel, n_valid=n,
        label_smoothing=float(label_smoothing), block_rows=block_rows)

    # TODO(synk): on v7x the single grid axis runs on one TensorCore; a
    # CORE_PARALLEL leading axis (or pl.core_map) could shard the reduction 2x.
    partial_sums = pl.pallas_call(
        kernel,
        out_shape=jax.ShapeDtypeStruct((_SUBLANES, _LANES), jnp.float32),
        grid_spec=pltpu.PrefetchScalarGridSpec(
            num_scalar_prefetch=0,
            grid=(nb,),
            in_specs=[pl.BlockSpec((block_rows, _LANES), lambda i: (i, 0)),
                      pl.BlockSpec((block_rows, _LANES), lambda i: (i, 0))],
            out_specs=pl.BlockSpec((_SUBLANES, _LANES), lambda i: (0, 0)),
        ),
        compiler_params=pltpu.CompilerParams(
            dimension_semantics=("arbitrary",)),
    )(x2, t2)

    return jnp.sum(partial_sums) / n


def _reference(logits, target, label_smoothing):
    """Pure-JAX torch-parity reference (keeps the -100 log clamps)."""
    x = jnp.squeeze(logits).astype(jnp.float32).reshape(-1)
    t = jnp.squeeze(target).astype(jnp.float32).reshape(-1)
    bce = jnp.mean(jnp.maximum(x, 0.0) - x * t + jnp.log1p(jnp.exp(-jnp.abs(x))))
    p = jax.nn.sigmoid(x)
    ent = jnp.mean(-(p * jnp.maximum(jnp.log(p), -100.0)
                     + (1.0 - p) * jnp.maximum(jnp.log(1.0 - p), -100.0)))
    return bce - label_smoothing * ent


if __name__ == "__main__":
    key = jax.random.PRNGKey(0)
    k1, k2, k3, k4 = jax.random.split(key, 4)
    label_smoothing = 0.1

    # Case 1: binary-classifier head — logits (batch, 1), targets in {0,1}.
    batch = 256
    logits = jax.random.normal(k1, (batch, 1), dtype=jnp.float32) * 2.0
    target = (jax.random.uniform(k2, (batch, 1)) > 0.5).astype(jnp.float32)
    loss = jax.block_until_ready(
        bce_with_logits_loss_smoothed(logits, target, label_smoothing))
    ref = _reference(logits, target, label_smoothing)
    assert jnp.allclose(loss, ref, atol=1e-5, rtol=5e-4), (loss, ref)

    # Case 2: ragged multi-block flat input exercising tiling, accumulation
    # across grid steps and the tail mask (small block_rows keeps shapes small).
    n2 = 3 * 8 * 128 + 77      # 3149 elements -> 4 grid steps at block_rows=8
    logits2 = jax.random.normal(k3, (n2,), dtype=jnp.float32) * 3.0
    target2 = (jax.random.uniform(k4, (n2,)) > 0.5).astype(jnp.float32)
    loss2 = jax.block_until_ready(
        bce_with_logits_loss_smoothed(logits2, target2, label_smoothing,
                                      block_rows=8))
    ref2 = _reference(logits2, target2, label_smoothing)
    assert jnp.allclose(loss2, ref2, atol=1e-5, rtol=5e-4), (loss2, ref2)

    print("KERNEL_OK")
</pallas_src>

<mosaic_0001>
module attributes {stable_mosaic.version = 11 : i64} {
  func.func @_bce_smoothed_kernel(%arg0: i32, %arg1: memref<8x128xf32, #tpu.memory_space<vmem>>, %arg2: memref<8x128xf32, #tpu.memory_space<vmem>>, %arg3: memref<8x128xf32, #tpu.memory_space<vmem>>) attributes {dimension_semantics = [#tpu.dimension_semantics<arbitrary>], iteration_bounds = array<i64: 1>, scalar_prefetch = 0 : i64, scratch_operands = 0 : i64, tpu.core_type = #tpu.core_type<tc>, window_params = [{transform_indices = @transform_0, window_bounds = array<i64: 8, 128>}, {transform_indices = @transform_1, window_bounds = array<i64: 8, 128>}, {pipeline_mode = #tpu.pipeline_mode<synchronous>, transform_indices = @transform_2, window_bounds = array<i64: 8, 128>}]} {
    %c0_i32 = arith.constant 0 : i32
    %0 = arith.cmpi eq, %arg0, %c0_i32 : i32
    %1 = arith.extui %0 : i1 to i32
    %c0_i32_0 = arith.constant 0 : i32
    %2 = arith.cmpi ne, %1, %c0_i32_0 : i32
    scf.if %2 {
      %cst_13 = arith.constant 0.000000e+00 : f32
      %36 = vector.broadcast %cst_13 : f32 to vector<8x128xf32>
      %c0_14 = arith.constant 0 : index
      %c0_15 = arith.constant 0 : index
      %37 = vector.load %arg3[%c0_14, %c0_15] : memref<8x128xf32, #tpu.memory_space<vmem>>, vector<8x128xf32>
      tpu.vector_store %arg3[%c0_14, %c0_15], %36 {strides = array<i32>} : memref<8x128xf32, #tpu.memory_space<vmem>>, vector<8x128xf32>,
    } else {
    }
    %c0 = arith.constant 0 : index
    %c0_1 = arith.constant 0 : index
    %3 = vector.load %arg1[%c0, %c0_1] : memref<8x128xf32, #tpu.memory_space<vmem>>, vector<8x128xf32>
    %c0_2 = arith.constant 0 : index
    %c0_3 = arith.constant 0 : index
    %4 = vector.load %arg2[%c0_2, %c0_3] : memref<8x128xf32, #tpu.memory_space<vmem>>, vector<8x128xf32>
    %5 = math.absf %3 : vector<8x128xf32>
    %cst = arith.constant 0.000000e+00 : f32
    %6 = vector.broadcast %cst : f32 to vector<8x128xf32>
    %7 = arith.subf %6, %5 : vector<8x128xf32>
    %8 = math.exp %7 : vector<8x128xf32>
    %cst_4 = arith.constant 0.000000e+00 : f32
    %9 = vector.broadcast %cst_4 : f32 to vector<8x128xf32>
    %10 = arith.maximumf %3, %9 : vector<8x128xf32>
    %11 = math.log1p %8 : vector<8x128xf32>
    %12 = arith.addf %10, %11 : vector<8x128xf32>
    %cst_5 = arith.constant 1.000000e+00 : f32
    %13 = vector.broadcast %cst_5 : f32 to vector<8x128xf32>
    %14 = arith.addf %13, %8 : vector<8x128xf32>
    %15 = tpu.reciprocal %14 {approx = true} : vector<8x128xf32> -> vector<8x128xf32>
    %cst_6 = arith.constant 0.000000e+00 : f32
    %16 = vector.broadcast %cst_6 : f32 to vector<8x128xf32>
    %17 = arith.cmpf oge, %3, %16 : vector<8x128xf32>
    %18 = arith.mulf %8, %15 : vector<8x128xf32>
    %19 = arith.select %17, %15, %18 : vector<8x128xi1>, vector<8x128xf32>
    %cst_7 = arith.constant 0.899999976 : f32
    %20 = vector.broadcast %cst_7 : f32 to vector<8x128xf32>
    %21 = arith.mulf %20, %12 : vector<8x128xf32>
    %22 = arith.mulf %3, %4 : vector<8x128xf32>
    %23 = arith.subf %21, %22 : vector<8x128xf32>
    %24 = arith.mulf %19, %3 : vector<8x128xf32>
    %cst_8 = arith.constant 1.000000e-01 : f32
    %25 = vector.broadcast %cst_8 : f32 to vector<8x128xf32>
    %26 = arith.mulf %25, %24 : vector<8x128xf32>
    %27 = arith.addf %23, %26 : vector<8x128xf32>
    %c1024_i32 = arith.constant 1024 : i32
    %28 = arith.muli %arg0, %c1024_i32 : i32
    %c1024_i32_9 = arith.constant 1024 : i32
    %29 = arith.addi %28, %c1024_i32_9 : i32
    %c256_i32 = arith.constant 256 : i32
    %30 = arith.cmpi sle, %29, %c256_i32 : i32
    %31 = arith.extui %30 : i1 to i32
    %c0_i32_10 = arith.constant 0 : i32
    %32 = arith.cmpi ne, %31, %c0_i32_10 : i32
    scf.if %32 {
      %c0_13 = arith.constant 0 : index
      %c0_14 = arith.constant 0 : index
      %36 = vector.load %arg3[%c0_13, %c0_14] : memref<8x128xf32, #tpu.memory_space<vmem>>, vector<8x128xf32>
      %37 = vector.shape_cast %27 : vector<8x128xf32> to vector<1x8x128xf32>
      %cst_15 = arith.constant dense<0.000000e+00> : vector<8x128xf32>
      %38 = vector.multi_reduction <add>, %37, %cst_15 [0] : vector<1x8x128xf32> to vector<8x128xf32>
      %39 = arith.addf %36, %38 : vector<8x128xf32>
      %c0_16 = arith.constant 0 : index
      %c0_17 = arith.constant 0 : index
      %40 = vector.load %arg3[%c0_16, %c0_17] : memref<8x128xf32, #tpu.memory_space<vmem>>, vector<8x128xf32>
      tpu.vector_store %arg3[%c0_16, %c0_17], %39 {strides = array<i32>} : memref<8x128xf32, #tpu.memory_space<vmem>>, vector<8x128xf32>,
    } else {
    }
    %c256_i32_11 = arith.constant 256 : i32
    %33 = arith.cmpi sgt, %29, %c256_i32_11 : i32
    %34 = arith.extui %33 : i1 to i32
    %c0_i32_12 = arith.constant 0 : i32
    %35 = arith.cmpi ne, %34, %c0_i32_12 : i32
    scf.if %35 {
      %36 = tpu.iota {dimensions = array<i32: 0>} : vector<8x128xi32>
      %37 = tpu.iota {dimensions = array<i32: 1>} : vector<8x128xi32>
      %c128_i32 = arith.constant 128 : i32
      %38 = vector.broadcast %c128_i32 : i32 to vector<8x128xi32>
      %39 = arith.muli %36, %38 : vector<8x128xi32>
      %40 = vector.broadcast %28 : i32 to vector<8x128xi32>
      %41 = arith.addi %40, %39 : vector<8x128xi32>
      %42 = arith.addi %41, %37 : vector<8x128xi32>
      %c0_13 = arith.constant 0 : index
      %c0_14 = arith.constant 0 : index
      %43 = vector.load %arg3[%c0_13, %c0_14] : memref<8x128xf32, #tpu.memory_space<vmem>>, vector<8x128xf32>
      %c256_i32_15 = arith.constant 256 : i32
      %44 = vector.broadcast %c256_i32_15 : i32 to vector<8x128xi32>
      %45 = arith.cmpi slt, %42, %44 : vector<8x128xi32>
      %cst_16 = arith.constant 0.000000e+00 : f32
      %46 = vector.broadcast %cst_16 : f32 to vector<8x128xf32>
      %47 = arith.select %45, %27, %46 : vector<8x128xi1>, vector<8x128xf32>
      %48 = vector.shape_cast %47 : vector<8x128xf32> to vector<1x8x128xf32>
      %cst_17 = arith.constant dense<0.000000e+00> : vector<8x128xf32>
      %49 = vector.multi_reduction <add>, %48, %cst_17 [0] : vector<1x8x128xf32> to vector<8x128xf32>
      %50 = arith.addf %43, %49 : vector<8x128xf32>
      %c0_18 = arith.constant 0 : index
      %c0_19 = arith.constant 0 : index
      %51 = vector.load %arg3[%c0_18, %c0_19] : memref<8x128xf32, #tpu.memory_space<vmem>>, vector<8x128xf32>
      tpu.vector_store %arg3[%c0_18, %c0_19], %50 {strides = array<i32>} : memref<8x128xf32, #tpu.memory_space<vmem>>, vector<8x128xf32>,
    } else {
    }
    return
  }
  func.func @transform_0(%arg0: i32) -> (i32, i32) {
    %c0_i32 = arith.constant 0 : i32
    %c0_i32_0 = arith.constant 0 : i32
    return %arg0, %c0_i32 : i32, i32
  }
  func.func @transform_1(%arg0: i32) -> (i32, i32) {
    %c0_i32 = arith.constant 0 : i32
    %c0_i32_0 = arith.constant 0 : i32
    return %arg0, %c0_i32 : i32, i32
  }
  func.func @transform_2(%arg0: i32) -> (i32, i32) {
    %c0_i32 = arith.constant 0 : i32
    %c0_i32_0 = arith.constant 0 : i32
    %c0_i32_1 = arith.constant 0 : i32
    return %c0_i32, %c0_i32_0 : i32, i32
  }
}

</mosaic_0001>

<llo_original>
// kernel: tpu_custom_call.1
$region0: #{tpu_custom_call.1}
  #allocation0 [shape = 'u32[]', space=smem, size = 0x4, offset = 0x4, fixed_abs, tag = 'smem constant byte address 0x4 - core index']
  #allocation1 [shape = 'u32[144,128]{1,0:T(1,128)}', space=vmem, size = 0x12000, scoped, tag = 'internal scratch']
  %s0 = inlined_call_operand.hbm [shape: f32[8,128], index: 0, kind: input, shape index: {}]
  %s1 = inlined_call_operand.hbm [shape: f32[8,128], index: 1, kind: input, shape index: {}]
  %s2 = inlined_call_operand.hbm [shape: f32[8,128], index: 2, kind: output, shape index: {}]
  %s3 = sld [smem:[#allocation0]]
  $region38: #{tpu_custom_call.1} parent=0
    _
  %s5 = ssub.s32 1, %s3
  %s6 = scalar_select 0, %s5, %s3
  $region1: #{tpu_custom_call.1} parent=0
    #allocation2 [shape = 'u8[4096]{0}', space=vmem, size = 0x1000, scoped, tag = 'input window, operand 0, single buffered']
    #allocation3 [shape = 's32[1]{0}', space=sflag, size = 0x4, scoped, tag = 'scoped memory for tpu_custom_call.1']
    #allocation4 [shape = 's32[1]{0}', space=sflag, size = 0x4, scoped, tag = 'scoped memory for tpu_custom_call.1']
    #allocation5 [shape = 'u8[4096]{0}', space=vmem, size = 0x1000, scoped, tag = 'input window, operand 1, single buffered']
    #allocation6 [shape = 's32[1]{0}', space=sflag, size = 0x4, scoped, tag = 'scoped memory for tpu_custom_call.1']
    #allocation7 [shape = 'u8[4096]{0}', space=vmem, size = 0x1000, scoped, tag = 'output window, operand 0, single buffered']
    %7 = vsyncpa [#allocation3], 0
    %8 = vsyncpa [#allocation6], 0
    %9 = vsyncpa [#allocation4], 0
    // Predicated region
    $region2: #{tpu_custom_call.1} parent=1 // pred_check
      _
    $region3: #{tpu_custom_call.1} parent=1 // pred_check_branch
      %11 = sbr.rel (0) target = $region5
    $region4: #{tpu_custom_call.1} parent=1 // pred_region
      %s13 = ssub.s32 128, 128
      %14 = vsyncadd [#allocation3], %s13
      %s16 = sshll.u32 [#allocation2], 4
      %s17 = int_to_ptr.vmem [resolvable:$true] %s16
      %19 = dma.hbm_to_vmem [thread:$0]  %s0, 128, %s17, [#allocation3]
    $region5: #{tpu_custom_call.1} parent=1 // pred_fallthru
      _
    // Predicated region
    $region6: #{tpu_custom_call.1} parent=1 // pred_check
      _
    $region7: #{tpu_custom_call.1} parent=1 // pred_check_branch
      %21 = sbr.rel (0) target = $region9
    $region8: #{tpu_custom_call.1} parent=1 // pred_region
      %s23 = ssub.s32 128, 128
      %24 = vsyncadd [#allocation6], %s23
      %s26 = sshll.u32 [#allocation5], 4
      %s27 = int_to_ptr.vmem [resolvable:$true] %s26
      %29 = dma.hbm_to_vmem [thread:$0]  %s1, 128, %s27, [#allocation6]
    $region9: #{tpu_custom_call.1} parent=1 // pred_fallthru
      _
    // Predicated region
    $region10: #{tpu_custom_call.1} parent=1 // pred_check
      _
    $region11: #{tpu_custom_call.1} parent=1 // pred_check_branch
      %31 = sbr.rel (0) target = $region13
    $region12: #{tpu_custom_call.1} parent=1 // pred_region
      %32 = dma.done [#allocation3], 128
    $region13: #{tpu_custom_call.1} parent=1 // pred_fallthru
      _
    // Predicated region
    $region14: #{tpu_custom_call.1} parent=1 // pred_check
      _
    $region15: #{tpu_custom_call.1} parent=1 // pred_check_branch
      %34 = sbr.rel (0) target = $region17
    $region16: #{tpu_custom_call.1} parent=1 // pred_region
      %35 = dma.done [#allocation6], 128
    $region17: #{tpu_custom_call.1} parent=1 // pred_fallthru
      _
    %p36 = scmp.eq.s32.totalorder 0, 0
    // Predicated region
    $region18: #{tpu_custom_call.1} parent=1 // pred_check
      %p37 = pneg %p36
    $region19: #{tpu_custom_call.1} parent=1 // pred_check_branch
      %39 = sbr.rel (%p37) target = $region21
    $region20: #{tpu_custom_call.1} parent=1 // pred_region
      %40 = vst [vmem:[#allocation7] sm:$0xff] 0.0
    $region21: #{tpu_custom_call.1} parent=1 // pred_fallthru
      _
    %v41 = vld [vmem:[#allocation2] sm:$0xff]
    %v42 = vld [vmem:[#allocation5] sm:$0xff]
    %v43 = vand.u32 2147483647, %v41
    %v44 = vsub.f32 0.0, %v43
    %v45 = vmul.f32 %v44, 1.442695
    %v46 = vpow.pop %v45
    %v47 = vmax.f32 %v41, 0.0
    %v48 = vadd.f32 %v46, 1.0
    %v49 = vlog2.pop %v48
    %v50 = vmul.f32 %v49, 0.6931472
    %v51 = vmul.f32 -0.5, %v46
    %v52 = vadd.f32 %v51, 1.0
    %v53 = vmul.f32 %v52, %v46
    %v54 = vand.u32 2147483647, %v46
    %vm55 = vcmp.lt.f32.partialorder %v54, 0.0004427343
    %v56 = vsel %vm55, %v53, %v50
    %v57 = vadd.f32 %v47, %v56
    %v58 = vadd.f32 %v46, 1.0
    %v59 = vrcp.pop %v58
    %vm60 = vcmp.ge.f32.partialorder %v41, 0.0
    %v61 = vmul.f32 %v46, %v59
    %v62 = vsel %vm60, %v59, %v61
    %v63 = vmul.f32 %v57, 0.9
    %v64 = vmul.f32 %v41, %v42
    %v65 = vsub.f32 %v63, %v64
    %v66 = vmul.f32 %v62, %v41
    %v67 = vmul.f32 %v66, 0.1
    %v68 = vadd.f32 %v65, %v67
    %s69 = smul.u32 0, 1024
    %s70 = sadd.s32 %s69, 1024
    %p71 = scmp.le.s32.totalorder %s70, 256
    // Predicated region
    $region22: #{tpu_custom_call.1} parent=1 // pred_check
      %p72 = pneg %p71
    $region23: #{tpu_custom_call.1} parent=1 // pred_check_branch
      %74 = sbr.rel (%p72) target = $region25
    $region24: #{tpu_custom_call.1} parent=1 // pred_region
      %v75 = vld [vmem:[#allocation7] sm:$0xff]
      %v76 = vadd.f32 %v68, 0.0
      %v77 = vadd.f32 %v75, %v76
      %78 = vst [vmem:[#allocation7] sm:$0xff] %v77
    $region25: #{tpu_custom_call.1} parent=1 // pred_fallthru
      _
    %p79 = scmp.gt.s32.totalorder %s70, 256
    // Predicated region
    $region26: #{tpu_custom_call.1} parent=1 // pred_check
      %p80 = pneg %p79
    $region27: #{tpu_custom_call.1} parent=1 // pred_check_branch
      %82 = sbr.rel (%p80) target = $region29
    $region28: #{tpu_custom_call.1} parent=1 // pred_region
      %v83 = vlaneseq
      %v84 = vshrl.u32 %v83, 7
      %v85 = vlaneseq
      %v86 = vand.u32 %v85, 127
      %v87 = vmul.u32 %v84, 128
      %v88 = vstv %s69
      %v89 = vadd.s32 %v88, %v87
      %v90 = vadd.s32 %v89, %v86
      %v91 = vld [vmem:[#allocation7] sm:$0xff]
      %vm92 = vcmp.lt.s32.totalorder %v90, 256
      %v93 = vsel %vm92, %v68, 0.0
      %v94 = vadd.f32 %v93, 0.0
      %v95 = vadd.f32 %v91, %v94
      %96 = vst [vmem:[#allocation7] sm:$0xff] %v95
    $region29: #{tpu_custom_call.1} parent=1 // pred_fallthru
      _
    // Predicated region
    $region30: #{tpu_custom_call.1} parent=1 // pred_check
      _
    $region31: #{tpu_custom_call.1} parent=1 // pred_check_branch
      %98 = sbr.rel (0) target = $region33
    $region32: #{tpu_custom_call.1} parent=1 // pred_region
      %s100 = ssub.s32 128, 128
      %101 = vsyncadd [#allocation4], %s100
      %s103 = sshll.u32 [#allocation7], 4
      %s104 = int_to_ptr.vmem [resolvable:$true] %s103
      %106 = dma.vmem_to_hbm [thread:$0]  %s104, 128, %s2, [#allocation4]
    $region33: #{tpu_custom_call.1} parent=1 // pred_fallthru
      _
    // Predicated region
    $region34: #{tpu_custom_call.1} parent=1 // pred_check
      _
    $region35: #{tpu_custom_call.1} parent=1 // pred_check_branch
      %108 = sbr.rel (0) target = $region37
    $region36: #{tpu_custom_call.1} parent=1 // pred_region
      %109 = dma.done [#allocation4], 128
    $region37: #{tpu_custom_call.1} parent=1 // pred_fallthru
      _
    %110 = vsyncpa [#allocation3], 1
    %111 = vsyncpa [#allocation6], 1
    %112 = vsyncpa [#allocation4], 1

</llo_original>
